<compile_context>
chip_gen: v5e
topology: v5e:2x2
jax: 0.10.0
libtpu: 0.0.40
codegen_flags: <defaults>
</compile_context>

<pallas_src>
import jax
import jax.numpy as jnp
from jax.experimental import pallas as pl
from jax.experimental.pallas import tpu as pltpu

EPS = 1e-5


def _round_up(a, m):
    return ((a + m - 1) // m) * m


def _hw_config():
    """Per-generation sizing (VMEM differs: 128 MiB v5e/v6e, 64 MiB/TC v7x)."""
    try:
        info = pltpu.get_tpu_info()
        vmem_cap = int(getattr(info, "vmem_capacity_bytes", 64 * 1024 * 1024))
    except Exception:
        vmem_cap = 64 * 1024 * 1024          # conservative fallback
    if vmem_cap >= 100 * 1024 * 1024:        # v5e / v6e class
        return {"vmem_limit": 96 * 1024 * 1024,
                "fused_max_rows": 4096,
                "tile_cap": 2048}
    else:                                    # v7x class (64 MiB per TC)
        return {"vmem_limit": 48 * 1024 * 1024,
                "fused_max_rows": 2048,
                "tile_cap": 1024}


# ----------------------------------------------------------------------------
# Fused single-launch kernel (whole batch resident in VMEM).
# Handles ragged batches: BN stats are masked to the first n_valid rows.
# ----------------------------------------------------------------------------
def _make_fused_kernel(n_valid, n_pad):
    need_mask = (n_pad != n_valid)
    inv_n = 1.0 / float(n_valid)

    def kernel(x_ref, w1_ref, b1_ref, g1_ref, be1_ref,
               w2_ref, b2_ref, g2_ref, be2_ref,
               w3_ref, b3_ref, o_ref):
        if need_mask:
            rows = jax.lax.broadcasted_iota(jnp.int32, (n_pad, 1), 0)
            valid = (rows < n_valid).astype(jnp.float32)     # (n_pad, 1)
        else:
            valid = None

        def bn_scale_shift(h, g, be):
            # Centered (two-pass) variance: cheap here, more accurate than
            # E[x^2]-E[x]^2 for batch statistics.
            hm = h * valid if need_mask else h
            mu = jnp.sum(hm, axis=0, keepdims=True) * inv_n
            d = h - mu
            if need_mask:
                d = d * valid
            var = jnp.sum(d * d, axis=0, keepdims=True) * inv_n
            s = g * jax.lax.rsqrt(var + EPS)
            t = be - mu * s
            return s, t

        # ---- Linear(196, 200) + ReLU (bf16 MXU, f32 accumulate) ----
        xb = x_ref[...].astype(jnp.bfloat16)
        h1 = jnp.dot(xb, w1_ref[...], preferred_element_type=jnp.float32) + b1_ref[...]
        h1 = jnp.maximum(h1, 0.0)

        # ---- BatchNorm1d(200), folded scale/shift ----
        s1, t1 = bn_scale_shift(h1, g1_ref[...], be1_ref[...])
        h1n = h1 * s1 + t1

        # ---- Linear(200, 84) + ReLU ----
        h2 = jnp.dot(h1n.astype(jnp.bfloat16), w2_ref[...],
                     preferred_element_type=jnp.float32) + b2_ref[...]
        h2 = jnp.maximum(h2, 0.0)

        # ---- BatchNorm1d(84), folded scale/shift ----
        s2, t2 = bn_scale_shift(h2, g2_ref[...], be2_ref[...])
        h2n = h2 * s2 + t2

        # ---- Linear(84, 10) + Softmax(dim=1) ----
        logits = jnp.dot(h2n.astype(jnp.bfloat16), w3_ref[...],
                         preferred_element_type=jnp.float32) + b3_ref[...]
        m = jnp.max(logits, axis=1, keepdims=True)
        e = jnp.exp(logits - m)
        o_ref[...] = e * pl.reciprocal(jnp.sum(e, axis=1, keepdims=True),
                                       approx=True)

    return kernel


def _fused_forward(x2d, n, w1b, b1r, g1r, be1r, w2b, b2r, g2r, be2r, w3b, b3r,
                   cfg):
    n_pad = _round_up(max(n, 1), 8)
    if n_pad != n:
        x2d = jnp.pad(x2d, ((0, n_pad - n), (0, 0)))
    vmem = pl.BlockSpec(memory_space=pltpu.MemorySpace.VMEM)
    out = pl.pallas_call(
        _make_fused_kernel(n, n_pad),
        out_shape=jax.ShapeDtypeStruct((n_pad, 10), jnp.float32),
        in_specs=[vmem] * 11,
        out_specs=vmem,
        compiler_params=pltpu.CompilerParams(
            vmem_limit_bytes=cfg["vmem_limit"]),
    )(x2d, w1b, b1r, g1r, be1r, w2b, b2r, g2r, be2r, w3b, b3r)
    return out[:n] if n_pad != n else out


# ----------------------------------------------------------------------------
# Batch-tiled 3-stage pipeline (very large batches).
# BN needs full-batch stats, so stages 1/2 accumulate sum / sum-of-squares
# across batch tiles into a resident (1, C) accumulator ("arbitrary" axis);
# BN is then folded into the NEXT Linear's weights (tiny one-time XLA glue),
# so the per-tile hot loop is just matmul + bias + relu + stats.
# Inter-stage activations are stored in bf16 (halves HBM traffic).
# ----------------------------------------------------------------------------
def _make_stage_kernel(tile, n_valid, num_tiles):
    """matmul + bias + relu, store bf16, accumulate (masked) f32 stats."""
    full_last = (n_valid % tile) == 0

    def kernel(x_ref, w_ref, b_ref, h_ref, sum_ref, sq_ref):
        i = pl.program_id(0)

        @pl.when(i == 0)
        def _():
            sum_ref[...] = jnp.zeros_like(sum_ref)
            sq_ref[...] = jnp.zeros_like(sq_ref)

        h = jnp.dot(x_ref[...].astype(jnp.bfloat16), w_ref[...],
                    preferred_element_type=jnp.float32) + b_ref[...]
        h = jnp.maximum(h, 0.0)
        h_ref[...] = h.astype(h_ref.dtype)

        if full_last:
            # No padded rows anywhere: unmasked stats on every tile.
            sum_ref[...] += jnp.sum(h, axis=0, keepdims=True)
            sq_ref[...] += jnp.sum(h * h, axis=0, keepdims=True)
        else:
            @pl.when(i < num_tiles - 1)
            def _():
                sum_ref[...] += jnp.sum(h, axis=0, keepdims=True)
                sq_ref[...] += jnp.sum(h * h, axis=0, keepdims=True)

            @pl.when(i == num_tiles - 1)
            def _():
                row = i * tile + jax.lax.broadcasted_iota(jnp.int32, h.shape, 0)
                hm = jnp.where(row < n_valid, h, 0.0)
                sum_ref[...] += jnp.sum(hm, axis=0, keepdims=True)
                sq_ref[...] += jnp.sum(hm * hm, axis=0, keepdims=True)

    return kernel


def _stage3_kernel(h2_ref, w3_ref, b3_ref, o_ref):
    # BN2 already folded into w3/b3.
    logits = jnp.dot(h2_ref[...], w3_ref[...],
                     preferred_element_type=jnp.float32) + b3_ref[...]
    m = jnp.max(logits, axis=1, keepdims=True)
    e = jnp.exp(logits - m)
    o_ref[...] = e * pl.reciprocal(jnp.sum(e, axis=1, keepdims=True),
                                   approx=True)


def _tiled_forward(x2d, n, w1b, b1r, g1r, be1r, w2f, b2r, g2r, be2r, w3f, b3r,
                   cfg):
    # Tiles are multiples of 16 (bf16 sublane packing of the h1/h2 blocks).
    tile = min(_round_up(max(n, 1), 16), cfg["tile_cap"])
    n_pad = _round_up(n, tile)
    if n_pad != n:
        x2d = jnp.pad(x2d, ((0, n_pad - n), (0, 0)))
    num_tiles = n_pad // tile
    inv_n = 1.0 / float(n)

    cp_arb = pltpu.CompilerParams(dimension_semantics=("arbitrary",),
                                  vmem_limit_bytes=cfg["vmem_limit"])
    cp_par = pltpu.CompilerParams(dimension_semantics=("parallel",),
                                  vmem_limit_bytes=cfg["vmem_limit"])

    # -------- stage 1: relu(x @ W1 + b1), BN1 sum / sum-of-squares ----------
    h1, sum1, sq1 = pl.pallas_call(
        _make_stage_kernel(tile, n, num_tiles),
        out_shape=(jax.ShapeDtypeStruct((n_pad, 200), jnp.bfloat16),
                   jax.ShapeDtypeStruct((1, 200), jnp.float32),
                   jax.ShapeDtypeStruct((1, 200), jnp.float32)),
        grid=(num_tiles,),
        in_specs=[pl.BlockSpec((tile, 196), lambda i: (i, 0)),
                  pl.BlockSpec((196, 200), lambda i: (0, 0)),
                  pl.BlockSpec((1, 200), lambda i: (0, 0))],
        out_specs=(pl.BlockSpec((tile, 200), lambda i: (i, 0)),
                   pl.BlockSpec((1, 200), lambda i: (0, 0)),
                   pl.BlockSpec((1, 200), lambda i: (0, 0))),
        compiler_params=cp_arb,
    )(x2d, w1b, b1r)

    # Fold BN1 into Linear2 (tiny one-time glue; exact algebra).
    # NOTE: E[x^2]-E[x]^2 variance in f32; acceptable at test tolerance.
    mu1 = sum1 * inv_n
    var1 = sq1 * inv_n - mu1 * mu1
    s1 = g1r * jax.lax.rsqrt(var1 + EPS)
    t1 = be1r - mu1 * s1
    w2p = (w2f * s1.reshape(-1, 1)).astype(jnp.bfloat16)      # (200, 84)
    b2p = t1 @ w2f + b2r                                      # (1, 84)

    # -------- stage 2: relu(h1 @ W2' + b2'), BN2 sums ------------------------
    h2, sum2, sq2 = pl.pallas_call(
        _make_stage_kernel(tile, n, num_tiles),
        out_shape=(jax.ShapeDtypeStruct((n_pad, 84), jnp.bfloat16),
                   jax.ShapeDtypeStruct((1, 84), jnp.float32),
                   jax.ShapeDtypeStruct((1, 84), jnp.float32)),
        grid=(num_tiles,),
        in_specs=[pl.BlockSpec((tile, 200), lambda i: (i, 0)),
                  pl.BlockSpec((200, 84), lambda i: (0, 0)),
                  pl.BlockSpec((1, 84), lambda i: (0, 0))],
        out_specs=(pl.BlockSpec((tile, 84), lambda i: (i, 0)),
                   pl.BlockSpec((1, 84), lambda i: (0, 0)),
                   pl.BlockSpec((1, 84), lambda i: (0, 0))),
        compiler_params=cp_arb,
    )(h1, w2p, b2p)

    # Fold BN2 into Linear3.
    mu2 = sum2 * inv_n
    var2 = sq2 * inv_n - mu2 * mu2
    s2 = g2r * jax.lax.rsqrt(var2 + EPS)
    t2 = be2r - mu2 * s2
    w3p = (w3f * s2.reshape(-1, 1)).astype(jnp.bfloat16)      # (84, 10)
    b3p = t2 @ w3f + b3r                                      # (1, 10)

    # -------- stage 3: logits + softmax (batch axis "parallel") --------------
    out_pad = pl.pallas_call(
        _stage3_kernel,
        out_shape=jax.ShapeDtypeStruct((n_pad, 10), jnp.float32),
        grid=(num_tiles,),
        in_specs=[pl.BlockSpec((tile, 84), lambda i: (i, 0)),
                  pl.BlockSpec((84, 10), lambda i: (0, 0)),
                  pl.BlockSpec((1, 10), lambda i: (0, 0))],
        out_specs=pl.BlockSpec((tile, 10), lambda i: (i, 0)),
        compiler_params=cp_par,
    )(h2, w3p, b3p)

    return out_pad[:n]


# ----------------------------------------------------------------------------
# Public forward (mirrors Pre_A_Loss1.forward).
# ----------------------------------------------------------------------------
def pre_a_loss1_forward(x, params, force_tiled=False, tile_cap=None):
    cfg = _hw_config()
    if tile_cap is not None:
        cfg = dict(cfg, tile_cap=tile_cap)

    n = x.shape[0]
    x2d = x.reshape(n, 196).astype(jnp.float32)                # x.view(-1, 196)

    (w1, b1, g1, be1, w2, b2, g2, be2, w3, b3) = params
    w1b = w1.astype(jnp.bfloat16)
    b1r, g1r, be1r = b1.reshape(1, -1), g1.reshape(1, -1), be1.reshape(1, -1)
    b2r, g2r, be2r = b2.reshape(1, -1), g2.reshape(1, -1), be2.reshape(1, -1)
    b3r = b3.reshape(1, -1)

    if (not force_tiled) and n <= cfg["fused_max_rows"]:
        return _fused_forward(x2d, n, w1b, b1r, g1r, be1r,
                              w2.astype(jnp.bfloat16), b2r, g2r, be2r,
                              w3.astype(jnp.bfloat16), b3r, cfg)
    # Tiled path folds BN into the next layer's weights in f32, so pass f32 W.
    return _tiled_forward(x2d, n, w1b, b1r, g1r, be1r,
                          w2, b2r, g2r, be2r, w3, b3r, cfg)


# ----------------------------------------------------------------------------
# Pure-JAX reference (f32 end-to-end) and parameter init.
# ----------------------------------------------------------------------------
def reference_forward(x, params):
    n = x.shape[0]
    x2d = x.reshape(n, 196).astype(jnp.float32)
    (w1, b1, g1, be1, w2, b2, g2, be2, w3, b3) = params
    h1 = jnp.maximum(x2d @ w1 + b1, 0.0)
    mu1 = jnp.mean(h1, axis=0)
    var1 = jnp.mean((h1 - mu1) ** 2, axis=0)
    h1n = (h1 - mu1) / jnp.sqrt(var1 + EPS) * g1 + be1
    h2 = jnp.maximum(h1n @ w2 + b2, 0.0)
    mu2 = jnp.mean(h2, axis=0)
    var2 = jnp.mean((h2 - mu2) ** 2, axis=0)
    h2n = (h2 - mu2) / jnp.sqrt(var2 + EPS) * g2 + be2
    logits = h2n @ w3 + b3
    return jax.nn.softmax(logits, axis=1)


def init_params(key):
    ks = jax.random.split(key, 6)
    # Linear weights stored as (in, out) so kernels compute x @ W + b.
    w1 = jax.random.normal(ks[0], (196, 200), jnp.float32) * 0.05
    b1 = jax.random.normal(ks[1], (200,), jnp.float32) * 0.05
    w2 = jax.random.normal(ks[2], (200, 84), jnp.float32) * 0.05
    b2 = jax.random.normal(ks[3], (84,), jnp.float32) * 0.05
    w3 = jax.random.normal(ks[4], (84, 10), jnp.float32) * 0.05
    b3 = jax.random.normal(ks[5], (10,), jnp.float32) * 0.05
    # BatchNorm affine params (PyTorch default init: gamma=1, beta=0).
    g1, be1 = jnp.ones((200,), jnp.float32), jnp.zeros((200,), jnp.float32)
    g2, be2 = jnp.ones((84,), jnp.float32), jnp.zeros((84,), jnp.float32)
    return (w1, b1, g1, be1, w2, b2, g2, be2, w3, b3)


if __name__ == "__main__":
    key = jax.random.PRNGKey(0)
    k_x, k_p, k_x2, k_x3 = jax.random.split(key, 4)

    params = init_params(k_p)

    # --- fused path, aligned batch: 8 images of 1x14x14 (196 features) ------
    x_small = jax.random.normal(k_x, (8, 1, 14, 14), jnp.float32)
    out_small = jax.block_until_ready(pre_a_loss1_forward(x_small, params))
    ref_small = reference_forward(x_small, params)
    assert out_small.shape == (8, 10)
    assert bool(jnp.all(jnp.abs(jnp.sum(out_small, axis=1) - 1.0) < 5e-3))
    assert bool(jnp.max(jnp.abs(out_small - ref_small)) < 3e-2)

    # --- fused path, ragged batch (9) exercises in-kernel BN row masking ----
    x_rag = jax.random.normal(k_x3, (9, 1, 14, 14), jnp.float32)
    out_rag = jax.block_until_ready(pre_a_loss1_forward(x_rag, params))
    ref_rag = reference_forward(x_rag, params)
    assert out_rag.shape == (9, 10)
    assert bool(jnp.max(jnp.abs(out_rag - ref_rag)) < 3e-2)

    # --- tiled 3-stage path: force it with a 16-row tile on a batch of 20 ---
    x_big = jax.random.normal(k_x2, (20, 1, 14, 14), jnp.float32)
    out_big = jax.block_until_ready(
        pre_a_loss1_forward(x_big, params, force_tiled=True, tile_cap=16))
    ref_big = reference_forward(x_big, params)
    assert out_big.shape == (20, 10)
    assert bool(jnp.max(jnp.abs(out_big - ref_big)) < 3e-2)

    print("KERNEL_OK")
</pallas_src>

<mosaic_0001>
module attributes {stable_mosaic.version = 11 : i64} {
  func.func @kernel(%arg0: memref<8x196xf32, #tpu.memory_space<vmem>>, %arg1: memref<196x200xbf16, #tpu.memory_space<vmem>>, %arg2: memref<1x200xf32, #tpu.memory_space<vmem>>, %arg3: memref<1x200xf32, #tpu.memory_space<vmem>>, %arg4: memref<1x200xf32, #tpu.memory_space<vmem>>, %arg5: memref<200x84xbf16, #tpu.memory_space<vmem>>, %arg6: memref<1x84xf32, #tpu.memory_space<vmem>>, %arg7: memref<1x84xf32, #tpu.memory_space<vmem>>, %arg8: memref<1x84xf32, #tpu.memory_space<vmem>>, %arg9: memref<84x10xbf16, #tpu.memory_space<vmem>>, %arg10: memref<1x10xf32, #tpu.memory_space<vmem>>, %arg11: memref<8x10xf32, #tpu.memory_space<vmem>>) attributes {dimension_semantics = [], scalar_prefetch = 0 : i64, scratch_operands = 0 : i64, tpu.core_type = #tpu.core_type<tc>} {
    %c0 = arith.constant 0 : index
    %c0_0 = arith.constant 0 : index
    %0 = vector.load %arg0[%c0, %c0_0] : memref<8x196xf32, #tpu.memory_space<vmem>>, vector<8x196xf32>
    %1 = arith.truncf %0 : vector<8x196xf32> to vector<8x196xbf16>
    %c0_1 = arith.constant 0 : index
    %c0_2 = arith.constant 0 : index
    %2 = vector.load %arg1[%c0_1, %c0_2] : memref<196x200xbf16, #tpu.memory_space<vmem>>, vector<196x200xbf16>
    %cst = arith.constant dense<0.000000e+00> : vector<8x200xf32>
    %3 = tpu.matmul %1, %2, %cst {dimension_numbers = #tpu.dot_dimension_numbers<[1], [0], [0], [1], [0, 0, 1, 1], [], []>} : vector<8x196xbf16>, vector<196x200xbf16>, vector<8x200xf32> -> vector<8x200xf32>
    %c0_3 = arith.constant 0 : index
    %c0_4 = arith.constant 0 : index
    %4 = vector.load %arg2[%c0_3, %c0_4] : memref<1x200xf32, #tpu.memory_space<vmem>>, vector<1x200xf32>
    %5 = vector.broadcast %4 : vector<1x200xf32> to vector<8x200xf32>
    %6 = arith.addf %3, %5 : vector<8x200xf32>
    %cst_5 = arith.constant 0.000000e+00 : f32
    %7 = vector.broadcast %cst_5 : f32 to vector<8x200xf32>
    %8 = arith.maximumf %6, %7 : vector<8x200xf32>
    %c0_6 = arith.constant 0 : index
    %c0_7 = arith.constant 0 : index
    %9 = vector.load %arg3[%c0_6, %c0_7] : memref<1x200xf32, #tpu.memory_space<vmem>>, vector<1x200xf32>
    %c0_8 = arith.constant 0 : index
    %c0_9 = arith.constant 0 : index
    %10 = vector.load %arg4[%c0_8, %c0_9] : memref<1x200xf32, #tpu.memory_space<vmem>>, vector<1x200xf32>
    %cst_10 = arith.constant dense<0.000000e+00> : vector<200xf32>
    %11 = vector.multi_reduction <add>, %8, %cst_10 [0] : vector<8x200xf32> to vector<200xf32>
    %12 = vector.shape_cast %11 : vector<200xf32> to vector<1x200xf32>
    %cst_11 = arith.constant 1.250000e-01 : f32
    %13 = vector.broadcast %cst_11 : f32 to vector<1x200xf32>
    %14 = arith.mulf %12, %13 : vector<1x200xf32>
    %15 = vector.broadcast %14 : vector<1x200xf32> to vector<8x200xf32>
    %16 = arith.subf %8, %15 : vector<8x200xf32>
    %17 = arith.mulf %16, %16 : vector<8x200xf32>
    %cst_12 = arith.constant dense<0.000000e+00> : vector<200xf32>
    %18 = vector.multi_reduction <add>, %17, %cst_12 [0] : vector<8x200xf32> to vector<200xf32>
    %19 = vector.shape_cast %18 : vector<200xf32> to vector<1x200xf32>
    %cst_13 = arith.constant 1.250000e-01 : f32
    %20 = vector.broadcast %cst_13 : f32 to vector<1x200xf32>
    %21 = arith.mulf %19, %20 : vector<1x200xf32>
    %cst_14 = arith.constant 9.99999974E-6 : f32
    %22 = vector.broadcast %cst_14 : f32 to vector<1x200xf32>
    %23 = arith.addf %21, %22 : vector<1x200xf32>
    %24 = math.rsqrt %23 : vector<1x200xf32>
    %25 = arith.mulf %9, %24 : vector<1x200xf32>
    %26 = arith.mulf %14, %25 : vector<1x200xf32>
    %27 = arith.subf %10, %26 : vector<1x200xf32>
    %28 = vector.broadcast %25 : vector<1x200xf32> to vector<8x200xf32>
    %29 = arith.mulf %8, %28 : vector<8x200xf32>
    %30 = vector.broadcast %27 : vector<1x200xf32> to vector<8x200xf32>
    %31 = arith.addf %29, %30 : vector<8x200xf32>
    %32 = arith.truncf %31 : vector<8x200xf32> to vector<8x200xbf16>
    %c0_15 = arith.constant 0 : index
    %c0_16 = arith.constant 0 : index
    %33 = vector.load %arg5[%c0_15, %c0_16] : memref<200x84xbf16, #tpu.memory_space<vmem>>, vector<200x84xbf16>
    %cst_17 = arith.constant dense<0.000000e+00> : vector<8x84xf32>
    %34 = tpu.matmul %32, %33, %cst_17 {dimension_numbers = #tpu.dot_dimension_numbers<[1], [0], [0], [1], [0, 0, 1, 1], [], []>} : vector<8x200xbf16>, vector<200x84xbf16>, vector<8x84xf32> -> vector<8x84xf32>
    %c0_18 = arith.constant 0 : index
    %c0_19 = arith.constant 0 : index
    %35 = vector.load %arg6[%c0_18, %c0_19] : memref<1x84xf32, #tpu.memory_space<vmem>>, vector<1x84xf32>
    %36 = vector.broadcast %35 : vector<1x84xf32> to vector<8x84xf32>
    %37 = arith.addf %34, %36 : vector<8x84xf32>
    %cst_20 = arith.constant 0.000000e+00 : f32
    %38 = vector.broadcast %cst_20 : f32 to vector<8x84xf32>
    %39 = arith.maximumf %37, %38 : vector<8x84xf32>
    %c0_21 = arith.constant 0 : index
    %c0_22 = arith.constant 0 : index
    %40 = vector.load %arg7[%c0_21, %c0_22] : memref<1x84xf32, #tpu.memory_space<vmem>>, vector<1x84xf32>
    %c0_23 = arith.constant 0 : index
    %c0_24 = arith.constant 0 : index
    %41 = vector.load %arg8[%c0_23, %c0_24] : memref<1x84xf32, #tpu.memory_space<vmem>>, vector<1x84xf32>
    %cst_25 = arith.constant dense<0.000000e+00> : vector<84xf32>
    %42 = vector.multi_reduction <add>, %39, %cst_25 [0] : vector<8x84xf32> to vector<84xf32>
    %43 = vector.shape_cast %42 : vector<84xf32> to vector<1x84xf32>
    %cst_26 = arith.constant 1.250000e-01 : f32
    %44 = vector.broadcast %cst_26 : f32 to vector<1x84xf32>
    %45 = arith.mulf %43, %44 : vector<1x84xf32>
    %46 = vector.broadcast %45 : vector<1x84xf32> to vector<8x84xf32>
    %47 = arith.subf %39, %46 : vector<8x84xf32>
    %48 = arith.mulf %47, %47 : vector<8x84xf32>
    %cst_27 = arith.constant dense<0.000000e+00> : vector<84xf32>
    %49 = vector.multi_reduction <add>, %48, %cst_27 [0] : vector<8x84xf32> to vector<84xf32>
    %50 = vector.shape_cast %49 : vector<84xf32> to vector<1x84xf32>
    %cst_28 = arith.constant 1.250000e-01 : f32
    %51 = vector.broadcast %cst_28 : f32 to vector<1x84xf32>
    %52 = arith.mulf %50, %51 : vector<1x84xf32>
    %cst_29 = arith.constant 9.99999974E-6 : f32
    %53 = vector.broadcast %cst_29 : f32 to vector<1x84xf32>
    %54 = arith.addf %52, %53 : vector<1x84xf32>
    %55 = math.rsqrt %54 : vector<1x84xf32>
    %56 = arith.mulf %40, %55 : vector<1x84xf32>
    %57 = arith.mulf %45, %56 : vector<1x84xf32>
    %58 = arith.subf %41, %57 : vector<1x84xf32>
    %59 = vector.broadcast %56 : vector<1x84xf32> to vector<8x84xf32>
    %60 = arith.mulf %39, %59 : vector<8x84xf32>
    %61 = vector.broadcast %58 : vector<1x84xf32> to vector<8x84xf32>
    %62 = arith.addf %60, %61 : vector<8x84xf32>
    %63 = arith.truncf %62 : vector<8x84xf32> to vector<8x84xbf16>
    %c0_30 = arith.constant 0 : index
    %c0_31 = arith.constant 0 : index
    %64 = vector.load %arg9[%c0_30, %c0_31] : memref<84x10xbf16, #tpu.memory_space<vmem>>, vector<84x10xbf16>
    %cst_32 = arith.constant dense<0.000000e+00> : vector<8x10xf32>
    %65 = tpu.matmul %63, %64, %cst_32 {dimension_numbers = #tpu.dot_dimension_numbers<[1], [0], [0], [1], [0, 0, 1, 1], [], []>} : vector<8x84xbf16>, vector<84x10xbf16>, vector<8x10xf32> -> vector<8x10xf32>
    %c0_33 = arith.constant 0 : index
    %c0_34 = arith.constant 0 : index
    %66 = vector.load %arg10[%c0_33, %c0_34] : memref<1x10xf32, #tpu.memory_space<vmem>>, vector<1x10xf32>
    %67 = vector.broadcast %66 : vector<1x10xf32> to vector<8x10xf32>
    %68 = arith.addf %65, %67 : vector<8x10xf32>
    %cst_35 = arith.constant dense<0xFF800000> : vector<8xf32>
    %69 = vector.multi_reduction <maximumf>, %68, %cst_35 [1] : vector<8x10xf32> to vector<8xf32>
    %70 = vector.shape_cast %69 : vector<8xf32> to vector<8x1xf32>
    %71 = vector.broadcast %70 : vector<8x1xf32> to vector<8x10xf32>
    %72 = arith.subf %68, %71 : vector<8x10xf32>
    %73 = math.exp %72 : vector<8x10xf32>
    %cst_36 = arith.constant dense<0.000000e+00> : vector<8xf32>
    %74 = vector.multi_reduction <add>, %73, %cst_36 [1] : vector<8x10xf32> to vector<8xf32>
    %75 = vector.shape_cast %74 : vector<8xf32> to vector<8x1xf32>
    %76 = tpu.reciprocal %75 {approx = true} : vector<8x1xf32> -> vector<8x1xf32>
    %77 = vector.broadcast %76 : vector<8x1xf32> to vector<8x10xf32>
    %78 = arith.mulf %73, %77 : vector<8x10xf32>
    %c0_37 = arith.constant 0 : index
    %c0_38 = arith.constant 0 : index
    %79 = vector.load %arg11[%c0_37, %c0_38] : memref<8x10xf32, #tpu.memory_space<vmem>>, vector<8x10xf32>
    tpu.vector_store %arg11[%c0_37, %c0_38], %78 {strides = array<i32>} : memref<8x10xf32, #tpu.memory_space<vmem>>, vector<8x10xf32>,
    return
  }
}

</mosaic_0001>

<llo_original>
// kernel: tpu_custom_call.1
$region0: #{tpu_custom_call.1}
  #allocation0 [shape = 'u32[]', space=smem, size = 0x4, offset = 0x4, fixed_abs, tag = 'smem constant byte address 0x4 - core index']
  #allocation1 [shape = 'u32[72,128]{1,0:T(1,128)}', space=vmem, size = 0x9000, scoped, tag = 'internal scratch']
  %s0 = inlined_call_operand.vmem [shape: f32[8,196], index: 0, kind: input, shape index: {}]
  %s1 = inlined_call_operand.vmem [shape: bf16[196,200], index: 1, kind: input, shape index: {}]
  %s2 = inlined_call_operand.vmem [shape: f32[1,200], index: 2, kind: input, shape index: {}]
  %s3 = inlined_call_operand.vmem [shape: f32[1,200], index: 3, kind: input, shape index: {}]
  %s4 = inlined_call_operand.vmem [shape: f32[1,200], index: 4, kind: input, shape index: {}]
  %s5 = inlined_call_operand.vmem [shape: bf16[200,84], index: 5, kind: input, shape index: {}]
  %s6 = inlined_call_operand.vmem [shape: f32[1,84], index: 6, kind: input, shape index: {}]
  %s7 = inlined_call_operand.vmem [shape: f32[1,84], index: 7, kind: input, shape index: {}]
  %s8 = inlined_call_operand.vmem [shape: f32[1,84], index: 8, kind: input, shape index: {}]
  %s9 = inlined_call_operand.vmem [shape: bf16[84,10], index: 9, kind: input, shape index: {}]
  %s10 = inlined_call_operand.vmem [shape: f32[1,10], index: 10, kind: input, shape index: {}]
  %s11 = inlined_call_operand.hbm [shape: f32[8,10], index: 11, kind: output, shape index: {}]
  %s12 = sld [smem:[#allocation0]]
  $region54: #{tpu_custom_call.1} parent=0
    _
  %s14 = ssub.s32 1, %s12
  %s15 = scalar_select 0, %s14, %s12
  $region1: #{tpu_custom_call.1} parent=0
    #allocation2 [shape = 'u8[4096]{0}', space=vmem, size = 0x1000, scoped, tag = 'output window, operand 0, single buffered']
    #allocation3 [shape = 's32[1]{0}', space=sflag, size = 0x4, scoped, tag = 'scoped memory for tpu_custom_call.1']
    %16 = vsyncpa [#allocation3], 0
    // Predicated region
    $region2: #{tpu_custom_call.1} parent=1 // pred_check
      _
    $region3: #{tpu_custom_call.1} parent=1 // pred_check_branch
      %18 = sbr.rel (0) target = $region5
    $region4: #{tpu_custom_call.1} parent=1 // pred_region
      _
    $region5: #{tpu_custom_call.1} parent=1 // pred_fallthru
      _
    // Predicated region
    $region6: #{tpu_custom_call.1} parent=1 // pred_check
      _
    $region7: #{tpu_custom_call.1} parent=1 // pred_check_branch
      %20 = sbr.rel (0) target = $region9
    $region8: #{tpu_custom_call.1} parent=1 // pred_region
      _
    $region9: #{tpu_custom_call.1} parent=1 // pred_fallthru
      _
    // Predicated region
    $region10: #{tpu_custom_call.1} parent=1 // pred_check
      _
    $region11: #{tpu_custom_call.1} parent=1 // pred_check_branch
      %22 = sbr.rel (0) target = $region13
    $region12: #{tpu_custom_call.1} parent=1 // pred_region
      _
    $region13: #{tpu_custom_call.1} parent=1 // pred_fallthru
      _
    // Predicated region
    $region14: #{tpu_custom_call.1} parent=1 // pred_check
      _
    $region15: #{tpu_custom_call.1} parent=1 // pred_check_branch
      %24 = sbr.rel (0) target = $region17
    $region16: #{tpu_custom_call.1} parent=1 // pred_region
      _
    $region17: #{tpu_custom_call.1} parent=1 // pred_fallthru
      _
    // Predicated region
    $region18: #{tpu_custom_call.1} parent=1 // pred_check
      _
    $region19: #{tpu_custom_call.1} parent=1 // pred_check_branch
      %26 = sbr.rel (0) target = $region21
    $region20: #{tpu_custom_call.1} parent=1 // pred_region
      _
    $region21: #{tpu_custom_call.1} parent=1 // pred_fallthru
      _
    // Predicated region
    $region22: #{tpu_custom_call.1} parent=1 // pred_check
      _
    $region23: #{tpu_custom_call.1} parent=1 // pred_check_branch
      %28 = sbr.rel (0) target = $region25
    $region24: #{tpu_custom_call.1} parent=1 // pred_region
      _
    $region25: #{tpu_custom_call.1} parent=1 // pred_fallthru
      _
    // Predicated region
    $region26: #{tpu_custom_call.1} parent=1 // pred_check
      _
    $region27: #{tpu_custom_call.1} parent=1 // pred_check_branch
      %30 = sbr.rel (0) target = $region29
    $region28: #{tpu_custom_call.1} parent=1 // pred_region
      _
    $region29: #{tpu_custom_call.1} parent=1 // pred_fallthru
      _
    // Predicated region
    $region30: #{tpu_custom_call.1} parent=1 // pred_check
      _
    $region31: #{tpu_custom_call.1} parent=1 // pred_check_branch
      %32 = sbr.rel (0) target = $region33
    $region32: #{tpu_custom_call.1} parent=1 // pred_region
      _
    $region33: #{tpu_custom_call.1} parent=1 // pred_fallthru
      _
    // Predicated region
    $region34: #{tpu_custom_call.1} parent=1 // pred_check
      _
    $region35: #{tpu_custom_call.1} parent=1 // pred_check_branch
      %34 = sbr.rel (0) target = $region37
    $region36: #{tpu_custom_call.1} parent=1 // pred_region
      _
    $region37: #{tpu_custom_call.1} parent=1 // pred_fallthru
      _
    // Predicated region
    $region38: #{tpu_custom_call.1} parent=1 // pred_check
      _
    $region39: #{tpu_custom_call.1} parent=1 // pred_check_branch
      %36 = sbr.rel (0) target = $region41
    $region40: #{tpu_custom_call.1} parent=1 // pred_region
      _
    $region41: #{tpu_custom_call.1} parent=1 // pred_fallthru
      _
    // Predicated region
    $region42: #{tpu_custom_call.1} parent=1 // pred_check
      _
    $region43: #{tpu_custom_call.1} parent=1 // pred_check_branch
      %38 = sbr.rel (0) target = $region45
    $region44: #{tpu_custom_call.1} parent=1 // pred_region
      _
    $region45: #{tpu_custom_call.1} parent=1 // pred_fallthru
      _
    %v40 = vld [vmem:[%s0] sm:$0xff]
    %v41 = vld [vmem:[%s0 + $0x8] sm:$0xff]
    %v42 = vpack.c.bf16 %v40, %v40
    %v43 = vpack.c.bf16 %v41, %v41
    %v44 = vld [vmem:[%s1] sm:$0xff]
    %v45 = vld [vmem:[%s1 + $0x8] sm:$0xff]
    %v46 = vld [vmem:[%s1 + $0x10] sm:$0xff]
    %v47 = vld [vmem:[%s1 + $0x18] sm:$0xff]
    %v48 = vld [vmem:[%s1 + $0x20] sm:$0xff]
    %v49 = vld [vmem:[%s1 + $0x28] sm:$0xff]
    %v50 = vld [vmem:[%s1 + $0x30] sm:$0xff]
    %v51 = vld [vmem:[%s1 + $0x38] sm:$0xff]
    %v52 = vld [vmem:[%s1 + $0x40] sm:$0xff]
    %v53 = vld [vmem:[%s1 + $0x48] sm:$0xff]
    %v54 = vld [vmem:[%s1 + $0x50] sm:$0xff]
    %v55 = vld [vmem:[%s1 + $0x58] sm:$0xff]
    %v56 = vld [vmem:[%s1 + $0x60] sm:$0xff]
    %v57 = vld [vmem:[%s1 + $0x68] sm:$0xff]
    %v58 = vld [vmem:[%s1 + $0x70] sm:$0xff]
    %v59 = vld [vmem:[%s1 + $0x78] sm:$0xff]
    %v60 = vld [vmem:[%s1 + $0x80] sm:$0xff]
    %v61 = vld [vmem:[%s1 + $0x88] sm:$0xff]
    %v62 = vld [vmem:[%s1 + $0x90] sm:$0xff]
    %v63 = vld [vmem:[%s1 + $0x98] sm:$0xff]
    %v64 = vld [vmem:[%s1 + $0xa0] sm:$0xff]
    %v65 = vld [vmem:[%s1 + $0xa8] sm:$0xff]
    %v66 = vld [vmem:[%s1 + $0xb0] sm:$0xff]
    %v67 = vld [vmem:[%s1 + $0xb8] sm:$0xff]
    %v68 = vld [vmem:[%s1 + $0xc0] sm:$0x33]
    %v69 = vld [vmem:[%s2] sm:$0x3]
    %v71 = vperm.slane %v69, 0
    %v72 = vperm.slane %v69, 1
    %v100 = vunpack.c.l.b16 %v44
    %v101 = vunpack.c.h.b16 %v44
    %v102 = vunpack.c.l.b16 %v45
    %v103 = vunpack.c.h.b16 %v45
    %v104 = vunpack.c.l.b16 %v46
    %v105 = vunpack.c.h.b16 %v46
    %v106 = vunpack.c.l.b16 %v47
    %v107 = vunpack.c.h.b16 %v47
    %v108 = vunpack.c.l.b16 %v48
    %v109 = vunpack.c.h.b16 %v48
    %v110 = vunpack.c.l.b16 %v49
    %v111 = vunpack.c.h.b16 %v49
    %v112 = vunpack.c.l.b16 %v50
    %v113 = vunpack.c.h.b16 %v50
    %v114 = vunpack.c.l.b16 %v51
    %v115 = vunpack.c.h.b16 %v51
    %v116 = vunpack.c.l.b16 %v52
    %v117 = vunpack.c.h.b16 %v52
    %v118 = vunpack.c.l.b16 %v53
    %v119 = vunpack.c.h.b16 %v53
    %v120 = vunpack.c.l.b16 %v54
    %v121 = vunpack.c.h.b16 %v54
    %v122 = vunpack.c.l.b16 %v55
    %v123 = vunpack.c.h.b16 %v55
    %v124 = vunpack.c.l.b16 %v56
    %v125 = vunpack.c.h.b16 %v56
    %v126 = vunpack.c.l.b16 %v57
    %v127 = vunpack.c.h.b16 %v57
    %v128 = vunpack.c.l.b16 %v58
    %v129 = vunpack.c.h.b16 %v58
    %v130 = vunpack.c.l.b16 %v59
    %v131 = vunpack.c.h.b16 %v59
    %v132 = vunpack.c.l.b16 %v60
    %v133 = vunpack.c.h.b16 %v60
    %v134 = vunpack.c.l.b16 %v61
    %v135 = vunpack.c.h.b16 %v61
    %v136 = vunpack.c.l.b16 %v62
    %v137 = vunpack.c.h.b16 %v62
    %v138 = vunpack.c.l.b16 %v63
    %v139 = vunpack.c.h.b16 %v63
    %v140 = vunpack.c.l.b16 %v64
    %v141 = vunpack.c.h.b16 %v64
    %v142 = vunpack.c.l.b16 %v65
    %v143 = vunpack.c.h.b16 %v65
    %v144 = vunpack.c.l.b16 %v66
    %v145 = vunpack.c.h.b16 %v66
    %v146 = vunpack.c.l.b16 %v67
    %v147 = vunpack.c.h.b16 %v67
    %v148 = vunpack.c.l.b16 %v68
    %v149 = vunpack.c.h.b16 %v68
    %v150 = vpack.c.b16 %v102, %v100
    %v151 = vpack.c.b16 %v103, %v101
    %v152 = vpack.c.b16 %v106, %v104
    %v153 = vpack.c.b16 %v107, %v105
    %v154 = vpack.c.b16 %v110, %v108
    %v155 = vpack.c.b16 %v111, %v109
    %v156 = vpack.c.b16 %v114, %v112
    %v157 = vpack.c.b16 %v115, %v113
    %v158 = vpack.c.b16 %v118, %v116
    %v159 = vpack.c.b16 %v119, %v117
    %v160 = vpack.c.b16 %v122, %v120
    %v161 = vpack.c.b16 %v123, %v121
    %v162 = vpack.c.b16 %v126, %v124
    %v163 = vpack.c.b16 %v127, %v125
    %v164 = vpack.c.b16 %v130, %v128
    %v165 = vpack.c.b16 %v131, %v129
    %v166 = vpack.c.b16 %v134, %v132
    %v167 = vpack.c.b16 %v135, %v133
    %v168 = vpack.c.b16 %v138, %v136
    %v169 = vpack.c.b16 %v139, %v137
    %v170 = vpack.c.b16 %v142, %v140
    %v171 = vpack.c.b16 %v143, %v141
    %v172 = vpack.c.b16 %v146, %v144
    %v173 = vpack.c.b16 %v147, %v145
    %v174 = vpack.c.b16 %v148, %v148
    %v175 = vpack.c.b16 %v149, %v149
    %vm200 = vcmask 556032
    %v202 = vsel %vm200, %v43, 0
    %vm204 = vcmask 1041408
    %v206 = vsel %vm204, %v174, 0
    %v209 = vsel %vm204, %v175, 0
    %211 = vmatpush.bf16.msra.mxu0 %v164
    %212 = vmatpush.bf16.msra.mxu0 %v162
    %213 = vmatpush.bf16.msra.mxu0 %v160
    %214 = vmatpush.bf16.msra.mxu0 %v158
    %215 = vmatpush.bf16.msra.mxu0 %v156
    %216 = vmatpush.bf16.msra.mxu0 %v154
    %217 = vmatpush.bf16.msra.mxu0 %v152
    %218 = vmatpush.bf16.msra.mxu0 %v150
    %219 = vmatmul.bf16.gmra.mxu0 %v42
    %v220 = vpop.f32.mrf.mxu0
    %v221 = vadd.f32 %v71, %v220
    %v222 = vpop.f32.mrf.mxu0
    %223 = vdwg.mxu0
    %224 = vmatpush.bf16.msra.mxu0 0
    %225 = vmatpush.bf16.msra.mxu0 0
    %226 = vmatpush.bf16.msra.mxu0 0
    %227 = vmatpush.bf16.msra.mxu0 %v206
    %228 = vmatpush.bf16.msra.mxu0 %v172
    %229 = vmatpush.bf16.msra.mxu0 %v170
    %230 = vmatpush.bf16.msra.mxu0 %v168
    %231 = vmatpush.bf16.msra.mxu0 %v166
    %232 = vmatmul.bf16.gmra.mxu0 %v202
    %v233 = vpop.f32.mrf.mxu0
    %v234 = vadd.f32 %v221, %v233
    %v235 = vpop.f32.mrf.mxu0
    %236 = vdwg.mxu0
    %237 = vmatpush.bf16.msra.mxu0 %v165
    %238 = vmatpush.bf16.msra.mxu0 %v163
    %239 = vmatpush.bf16.msra.mxu0 %v161
    %240 = vmatpush.bf16.msra.mxu0 %v159
    %241 = vmatpush.bf16.msra.mxu0 %v157
    %242 = vmatpush.bf16.msra.mxu0 %v155
    %243 = vmatpush.bf16.msra.mxu0 %v153
    %244 = vmatpush.bf16.msra.mxu0 %v151
    %245 = vmatmul.bf16.gmra.mxu0 %v42
    %v246 = vpop.f32.mrf.mxu0
    %v247 = vadd.f32 %v72, %v246
    %v248 = vpop.f32.mrf.mxu0
    %249 = vdwg.mxu0
    %250 = vmatpush.bf16.msra.mxu0 0
    %251 = vmatpush.bf16.msra.mxu0 0
    %252 = vmatpush.bf16.msra.mxu0 0
    %253 = vmatpush.bf16.msra.mxu0 %v209
    %254 = vmatpush.bf16.msra.mxu0 %v173
    %255 = vmatpush.bf16.msra.mxu0 %v171
    %256 = vmatpush.bf16.msra.mxu0 %v169
    %257 = vmatpush.bf16.msra.mxu0 %v167
    %258 = vmatmul.bf16.gmra.mxu0 %v202
    %v259 = vpop.f32.mrf.mxu0
    %v260 = vadd.f32 %v247, %v259
    %v261 = vpop.f32.mrf.mxu0
    %262 = vdwg.mxu0
    %v263 = vmax.f32 %v234, 0.0
    %v264 = vmax.f32 %v260, 0.0
    %v265 = vld [vmem:[%s3] sm:$0x3]
    %v266 = vld [vmem:[%s4] sm:$0x3]
    %v267 = vrot.slane %v263, 4
    %v268 = vadd.f32 %v263, %v267
    %v269 = vrot.slane %v268, 2
    %v270 = vadd.f32 %v268, %v269
    %v271 = vrot.slane %v270, 1
    %v272 = vadd.f32 %v270, %v271
    %vm273 = vcmask 588800
    %v274 = vsel %vm273, %v264, 0.0
    %v275 = vrot.slane %v274, 4
    %v276 = vadd.f32 %v274, %v275
    %v277 = vrot.slane %v276, 2
    %v278 = vadd.f32 %v276, %v277
    %v279 = vrot.slane %v278, 1
    %v280 = vadd.f32 %v278, %v279
    %v281 = vmul.f32 %v272, 0.125
    %v282 = vmul.f32 %v280, 0.125
    %v283 = vsub.f32 %v263, %v281
    %v284 = vsub.f32 %v264, %v282
    %v285 = vmul.f32 %v283, %v283
    %v286 = vmul.f32 %v284, %v284
    %v287 = vrot.slane %v285, 4
    %v288 = vadd.f32 %v285, %v287
    %v289 = vrot.slane %v288, 2
    %v290 = vadd.f32 %v288, %v289
    %v291 = vrot.slane %v290, 1
    %v292 = vadd.f32 %v290, %v291
    %v293 = vsel %vm273, %v286, 0.0
    %v294 = vrot.slane %v293, 4
    %v295 = vadd.f32 %v293, %v294
    %v296 = vrot.slane %v295, 2
    %v297 = vadd.f32 %v295, %v296
    %v298 = vrot.slane %v297, 1
    %v299 = vadd.f32 %v297, %v298
    %v300 = vmul.f32 %v292, 0.125
    %v301 = vmul.f32 %v299, 0.125
    %v302 = vadd.f32 %v300, 1e-05
    %v303 = vadd.f32 %v301, 1e-05
    %v304 = vrsqrt.pop %v302
    %v305 = vmul.f32 %v304, %v302
    %v306 = vmul.f32 %v305, %v304
    %v307 = vmul.f32 0.5, %v306
    %v308 = vsub.f32 1.5, %v307
    %v309 = vmul.f32 %v304, %v308
    %vm310 = vweird.f32 %v302
    %vm311 = vweird.f32 %v304
    %vm312 = vmor %vm310, %vm311
    %v313 = vsel %vm312, %v304, %v309
    %v314 = vrsqrt.pop %v303
    %v315 = vmul.f32 %v314, %v303
    %v316 = vmul.f32 %v315, %v314
    %v317 = vmul.f32 0.5, %v316
    %v318 = vsub.f32 1.5, %v317
    %v319 = vmul.f32 %v314, %v318
    %vm320 = vweird.f32 %v303
    %vm321 = vweird.f32 %v314
    %vm322 = vmor %vm320, %vm321
    %v323 = vsel %vm322, %v314, %v319
    %v326 = vrot.slane %v323, 7
    %vm327 = vcmask 1040384
    %v328 = vsel %vm327, %v313, %v326
    %v330 = vmul.f32 %v265, %v328
    %v332 = vperm.slane %v330, 0
    %v333 = vperm.slane %v330, 1
    %v336 = vmul.f32 %v281, %v332
    %v337 = vmul.f32 %v282, %v333
    %v340 = vrot.slane %v337, 7
    %v341 = vsel %vm327, %v336, %v340
    %v343 = vsub.f32 %v266, %v341
    %v344 = vmul.f32 %v263, %v332
    %v345 = vmul.f32 %v264, %v333
    %v347 = vperm.slane %v343, 0
    %v348 = vperm.slane %v343, 1
    %v351 = vadd.f32 %v344, %v347
    %v352 = vadd.f32 %v345, %v348
    %v353 = vpack.c.bf16 %v351, %v351
    %v354 = vpack.c.bf16 %v352, %v352
    %v355 = vld [vmem:[%s5] sm:$0xf]
    %v356 = vld [vmem:[%s5 + $0x4] sm:$0xf]
    %v357 = vld [vmem:[%s5 + $0x8] sm:$0xf]
    %v358 = vld [vmem:[%s5 + $0xc] sm:$0xf]
    %v359 = vld [vmem:[%s5 + $0x10] sm:$0xf]
    %v360 = vld [vmem:[%s5 + $0x14] sm:$0xf]
    %v361 = vld [vmem:[%s5 + $0x18] sm:$0xf]
    %v362 = vld [vmem:[%s5 + $0x1c] sm:$0xf]
    %v363 = vld [vmem:[%s5 + $0x20] sm:$0xf]
    %v364 = vld [vmem:[%s5 + $0x24] sm:$0xf]
    %v365 = vld [vmem:[%s5 + $0x28] sm:$0xf]
    %v366 = vld [vmem:[%s5 + $0x2c] sm:$0xf]
    %v367 = vld [vmem:[%s5 + $0x30] sm:$0xf]
    %v368 = vld [vmem:[%s5 + $0x34] sm:$0xf]
    %v369 = vld [vmem:[%s5 + $0x38] sm:$0xf]
    %v370 = vld [vmem:[%s5 + $0x3c] sm:$0xf]
    %v371 = vld [vmem:[%s5 + $0x40] sm:$0xf]
    %v372 = vld [vmem:[%s5 + $0x44] sm:$0xf]
    %v373 = vld [vmem:[%s5 + $0x48] sm:$0xf]
    %v374 = vld [vmem:[%s5 + $0x4c] sm:$0xf]
    %v375 = vld [vmem:[%s5 + $0x50] sm:$0xf]
    %v376 = vld [vmem:[%s5 + $0x54] sm:$0xf]
    %v377 = vld [vmem:[%s5 + $0x58] sm:$0xf]
    %v378 = vld [vmem:[%s5 + $0x5c] sm:$0xf]
    %v379 = vld [vmem:[%s5 + $0x60] sm:$0xf]
    %v380 = vld [vmem:[%s6] sm:$0x1]
    %v382 = vperm.slane %v380, 0
    %v409 = vunpack.c.l.b16 %v355
    %v410 = vunpack.c.l.b16 %v356
    %v411 = vunpack.c.l.b16 %v357
    %v412 = vunpack.c.l.b16 %v358
    %v413 = vunpack.c.l.b16 %v359
    %v414 = vunpack.c.l.b16 %v360
    %v415 = vunpack.c.l.b16 %v361
    %v416 = vunpack.c.l.b16 %v362
    %v417 = vunpack.c.l.b16 %v363
    %v418 = vunpack.c.l.b16 %v364
    %v419 = vunpack.c.l.b16 %v365
    %v420 = vunpack.c.l.b16 %v366
    %v421 = vunpack.c.l.b16 %v367
    %v422 = vunpack.c.l.b16 %v368
    %v423 = vunpack.c.l.b16 %v369
    %v424 = vunpack.c.l.b16 %v370
    %v425 = vunpack.c.l.b16 %v371
    %v426 = vunpack.c.l.b16 %v372
    %v427 = vunpack.c.l.b16 %v373
    %v428 = vunpack.c.l.b16 %v374
    %v429 = vunpack.c.l.b16 %v375
    %v430 = vunpack.c.l.b16 %v376
    %v431 = vunpack.c.l.b16 %v377
    %v432 = vunpack.c.l.b16 %v378
    %v433 = vunpack.c.l.b16 %v379
    %v434 = vpack.c.b16 %v410, %v409
    %v435 = vpack.c.b16 %v412, %v411
    %v436 = vpack.c.b16 %v414, %v413
    %v437 = vpack.c.b16 %v416, %v415
    %v438 = vpack.c.b16 %v418, %v417
    %v439 = vpack.c.b16 %v420, %v419
    %v440 = vpack.c.b16 %v422, %v421
    %v441 = vpack.c.b16 %v424, %v423
    %v442 = vpack.c.b16 %v426, %v425
    %v443 = vpack.c.b16 %v428, %v427
    %v444 = vpack.c.b16 %v430, %v429
    %v445 = vpack.c.b16 %v432, %v431
    %v446 = vpack.c.b16 %v433, %v433
    %v460 = vsel %vm273, %v354, 0
    %vm462 = vcmask 1043456
    %v464 = vsel %vm462, %v446, 0
    %466 = vmatpush.bf16.msra.mxu0 %v441
    %467 = vmatpush.bf16.msra.mxu0 %v440
    %468 = vmatpush.bf16.msra.mxu0 %v439
    %469 = vmatpush.bf16.msra.mxu0 %v438
    %470 = vmatpush.bf16.msra.mxu0 %v437
    %471 = vmatpush.bf16.msra.mxu0 %v436
    %472 = vmatpush.bf16.msra.mxu0 %v435
    %473 = vmatpush.bf16.msra.mxu0 %v434
    %474 = vmatmul.bf16.gmra.mxu0 %v353
    %v475 = vpop.f32.mrf.mxu0
    %v476 = vadd.f32 %v382, %v475
    %v477 = vpop.f32.mrf.mxu0
    %478 = vdwg.mxu0
    %479 = vmatpush.bf16.msra.mxu0 0
    %480 = vmatpush.bf16.msra.mxu0 0
    %481 = vmatpush.bf16.msra.mxu0 0
    %482 = vmatpush.bf16.msra.mxu0 %v464
    %483 = vmatpush.bf16.msra.mxu0 %v445
    %484 = vmatpush.bf16.msra.mxu0 %v444
    %485 = vmatpush.bf16.msra.mxu0 %v443
    %486 = vmatpush.bf16.msra.mxu0 %v442
    %487 = vmatmul.bf16.gmra.mxu0 %v460
    %v488 = vpop.f32.mrf.mxu0
    %v489 = vadd.f32 %v476, %v488
    %v490 = vpop.f32.mrf.mxu0
    %491 = vdwg.mxu0
    %v492 = vmax.f32 %v489, 0.0
    %v493 = vld [vmem:[%s7] sm:$0x1]
    %v494 = vld [vmem:[%s8] sm:$0x1]
    %vm495 = vcmask 687104
    %v496 = vsel %vm495, %v492, 0.0
    %v497 = vrot.slane %v496, 4
    %v498 = vadd.f32 %v496, %v497
    %v499 = vrot.slane %v498, 2
    %v500 = vadd.f32 %v498, %v499
    %v501 = vrot.slane %v500, 1
    %v502 = vadd.f32 %v500, %v501
    %v503 = vmul.f32 %v502, 0.125
    %v504 = vsub.f32 %v492, %v503
    %v505 = vmul.f32 %v504, %v504
    %v506 = vsel %vm495, %v505, 0.0
    %v507 = vrot.slane %v506, 4
    %v508 = vadd.f32 %v506, %v507
    %v509 = vrot.slane %v508, 2
    %v510 = vadd.f32 %v508, %v509
    %v511 = vrot.slane %v510, 1
    %v512 = vadd.f32 %v510, %v511
    %v513 = vmul.f32 %v512, 0.125
    %v514 = vadd.f32 %v513, 1e-05
    %v515 = vrsqrt.pop %v514
    %v516 = vmul.f32 %v515, %v514
    %v517 = vmul.f32 %v516, %v515
    %v518 = vmul.f32 0.5, %v517
    %v519 = vsub.f32 1.5, %v518
    %v520 = vmul.f32 %v515, %v519
    %vm521 = vweird.f32 %v514
    %vm522 = vweird.f32 %v515
    %vm523 = vmor %vm521, %vm522
    %v524 = vsel %vm523, %v515, %v520
    %v525 = vmul.f32 %v493, %v524
    %v526 = vmul.f32 %v503, %v525
    %v527 = vsub.f32 %v494, %v526
    %v529 = vperm.slane %v525, 0
    %v531 = vmul.f32 %v492, %v529
    %v533 = vperm.slane %v527, 0
    %v535 = vadd.f32 %v531, %v533
    %v536 = vpack.c.bf16 %v535, %v535
    %v537 = vld [vmem:[%s9] sm:$0xf]
    %v538 = vld [vmem:[%s9 + $0x4] sm:$0xf]
    %v539 = vld [vmem:[%s9 + $0x8] sm:$0xf]
    %v540 = vld [vmem:[%s9 + $0xc] sm:$0xf]
    %v541 = vld [vmem:[%s9 + $0x10] sm:$0xf]
    %v542 = vld [vmem:[%s9 + $0x14] sm:$0xf]
    %v543 = vld [vmem:[%s9 + $0x18] sm:$0xf]
    %v544 = vld [vmem:[%s9 + $0x1c] sm:$0xf]
    %v545 = vld [vmem:[%s9 + $0x20] sm:$0xf]
    %v546 = vld [vmem:[%s9 + $0x24] sm:$0xf]
    %v547 = vld [vmem:[%s9 + $0x28] sm:$0x3]
    %v548 = vld [vmem:[%s10] sm:$0x1]
    %v550 = vperm.slane %v548, 0
    %v563 = vunpack.c.l.b16 %v537
    %v564 = vunpack.c.l.b16 %v538
    %v565 = vunpack.c.l.b16 %v539
    %v566 = vunpack.c.l.b16 %v540
    %v567 = vunpack.c.l.b16 %v541
    %v568 = vunpack.c.l.b16 %v542
    %v569 = vunpack.c.l.b16 %v543
    %v570 = vunpack.c.l.b16 %v544
    %v571 = vunpack.c.l.b16 %v545
    %v572 = vunpack.c.l.b16 %v546
    %v573 = vunpack.c.l.b16 %v547
    %v574 = vpack.c.b16 %v564, %v563
    %v575 = vpack.c.b16 %v566, %v565
    %v576 = vpack.c.b16 %v568, %v567
    %v577 = vpack.c.b16 %v570, %v569
    %v578 = vpack.c.b16 %v572, %v571
    %v579 = vpack.c.b16 %v573, %v573
    %v586 = vsel %vm495, %v536, 0
    %v589 = vsel %vm204, %v579, 0
    %591 = vmatpush.bf16.msra.mxu0 0
    %592 = vmatpush.bf16.msra.mxu0 0
    %593 = vmatpush.bf16.msra.mxu0 %v589
    %594 = vmatpush.bf16.msra.mxu0 %v578
    %595 = vmatpush.bf16.msra.mxu0 %v577
    %596 = vmatpush.bf16.msra.mxu0 %v576
    %597 = vmatpush.bf16.msra.mxu0 %v575
    %598 = vmatpush.bf16.msra.mxu0 %v574
    %599 = vmatmul.bf16.gmra.mxu0 %v586
    %v600 = vpop.f32.mrf.mxu0
    %v601 = vadd.f32 %v550, %v600
    %v602 = vpop.f32.mrf.mxu0
    %603 = vdwg.mxu0
    %vm604 = vcmask 80896
    %v605 = vsel %vm604, %v601, -inf
    %606 = vmax.xlane.f32.xlu0 %v605
    %v607 = vpop.xlane.xlu0 %606
    %v608 = vsub.f32 %v601, %v607
    %v609 = vmul.f32 %v608, 1.442695
    %v610 = vpow.pop %v609
    %v611 = vsel %vm604, %v610, 0.0
    %612 = vadd.xlane.f32.xlu0 %v611
    %v613 = vpop.xlane.xlu0 %612
    %v614 = vrcp.pop %v613
    %v615 = vmul.f32 %v610, %v614
    %616 = vst.msk [vmem:[#allocation2] sm:$0xff] %vm604, %v615
    // Predicated region
    $region46: #{tpu_custom_call.1} parent=1 // pred_check
      _
    $region47: #{tpu_custom_call.1} parent=1 // pred_check_branch
      %618 = sbr.rel (0) target = $region49
    $region48: #{tpu_custom_call.1} parent=1 // pred_region
      %620 = vsyncadd [#allocation3], 0
      %s622 = sshll.u32 [#allocation2], 4
      %s623 = int_to_ptr.vmem [resolvable:$true] %s622
      %s624 = sshll.u32 %s11, 4
      %s625 = int_to_ptr.hbm [resolvable:$true] %s624
      %627 = dma.vmem_to_hbm [thread:$0]  %s623, 128, %s625, [#allocation3]
    $region49: #{tpu_custom_call.1} parent=1 // pred_fallthru
      _
    // Predicated region
    $region50: #{tpu_custom_call.1} parent=1 // pred_check
      _
    $region51: #{tpu_custom_call.1} parent=1 // pred_check_branch
      %629 = sbr.rel (0) target = $region53
    $region52: #{tpu_custom_call.1} parent=1 // pred_region
      %631 = dma.done [#allocation3], 128
    $region53: #{tpu_custom_call.1} parent=1 // pred_fallthru
      _
    %632 = vsyncpa [#allocation3], 1

</llo_original>
